<compile_context>
chip_gen: v7x
topology: tpu7x:2x2x1
jax: 0.10.0
libtpu: 0.0.40
codegen_flags: <defaults>
</compile_context>

<pallas_src>
import functools
from math import sqrt

import jax
import jax.numpy as jnp
import numpy as np
from jax import lax
from jax.experimental import pallas as pl
from jax.experimental.pallas import tpu as pltpu


def _round_up(x, m):
    return ((x + m - 1) // m) * m


def _gauss_conv_lrt_kernel(p_ref, wmu_ref, wvar_ref, bmu_ref, bvar_ref,
                           eps_ref, o_ref):
    """One M-tile of the LRT conv (everything lane-dense / zero-padded).

    p_ref    : (TILE_M, K_pad)     im2col patches of x
    wmu_ref  : (K_pad, Cout_pad)   flattened mean weights
    wvar_ref : (K_pad, Cout_pad)   flattened weight *variances* (precomputed)
    bmu_ref  : (1, Cout_pad)       bias mean
    bvar_ref : (1, Cout_pad)       bias variance (precomputed)
    eps_ref  : (TILE_M, Cout_pad)  standard-normal noise
    o_ref    : (TILE_M, Cout_pad)  output
    """
    p = p_ref[...]
    # mean path: conv(x, W_mu) + b_mu
    mean = jnp.dot(p, wmu_ref[...],
                   preferred_element_type=jnp.float32) + bmu_ref[...]
    # variance path: conv(x^2, var(W)) + var(b)   (x^2 patches == patches^2)
    var = jnp.dot(p * p, wvar_ref[...],
                  preferred_element_type=jnp.float32) + bvar_ref[...]
    # local reparameterization: mean + eps * sqrt(var)
    o_ref[...] = mean + eps_ref[...] * jnp.sqrt(var)


def gaussian_conv2d_lrt(x, weight_mu, weight_sigma, bias_mu, bias_sigma, eps,
                        *, stride=1, padding=0, dilation=1, var_type="sq",
                        tile_m=256):
    """x: (N, C, H, W) f32.  weight_*: (Cout, C, KH, KW).  bias_*: (Cout,).
    eps: (N, Cout, OH, OW) standard-normal noise.  Returns (N, Cout, OH, OW).

    tile_m: M-tile size; 256 here so small shapes still exercise multiple grid
    steps — for production-sized inputs use 512-1024 (still well within the
    32 MiB default scoped VMEM / v7x's 64 MiB physical VMEM at K_pad=128)."""
    N, C, H, W = x.shape
    Cout, Cin, KH, KW = weight_mu.shape
    assert Cin == C, "groups != 1 not supported"  # TODO(synk): grouped conv

    if padding:
        x = jnp.pad(x, ((0, 0), (0, 0), (padding, padding), (padding, padding)))
        H += 2 * padding
        W += 2 * padding

    OH = (H - dilation * (KH - 1) - 1) // stride + 1
    OW = (W - dilation * (KW - 1) - 1) // stride + 1

    # --- im2col (plain-JAX glue); ordering (c, kh, kw) matches torch's
    #     weight.reshape(Cout, C*KH*KW) flattening.
    # TODO(synk): for large H,W keep x in HBM (memory_space=pl.ANY) and build
    # patch tiles in-kernel via make_async_copy to avoid the KH*KW im2col blowup.
    cols = []
    for c in range(C):
        for i in range(KH):
            for j in range(KW):
                ii = i * dilation
                jj = j * dilation
                cols.append(
                    x[:, c,
                      ii: ii + stride * (OH - 1) + 1: stride,
                      jj: jj + stride * (OW - 1) + 1: stride]
                )  # (N, OH, OW)
    M = N * OH * OW
    K = C * KH * KW
    patches = jnp.stack(cols, axis=-1).reshape(M, K)

    # --- lane-dense padding targets
    M_pad = _round_up(M, tile_m)
    K_pad = _round_up(K, 128)
    Cout_pad = _round_up(Cout, 128)

    # --- hoist the sigma -> variance transform out of the kernel
    if var_type == "exp":
        w_var = jnp.exp(weight_sigma)
        b_var = jnp.exp(bias_mu)          # matches the torch code (exp(bias_mu))
    else:  # "sq"
        w_var = jnp.square(weight_sigma)
        b_var = jnp.square(bias_sigma)

    w_mu = weight_mu.reshape(Cout, K).T            # (K, Cout)
    w_var = w_var.reshape(Cout, K).T               # (K, Cout)

    # zero-pad: padded lanes/rows contribute exactly 0 to mean and var
    patches = jnp.pad(patches, ((0, M_pad - M), (0, K_pad - K)))
    w_mu = jnp.pad(w_mu, ((0, K_pad - K), (0, Cout_pad - Cout)))
    w_var = jnp.pad(w_var, ((0, K_pad - K), (0, Cout_pad - Cout)))
    b_mu = jnp.pad(bias_mu, (0, Cout_pad - Cout)).reshape(1, Cout_pad)
    b_var = jnp.pad(b_var, (0, Cout_pad - Cout)).reshape(1, Cout_pad)

    # noise stream, laid out to match the (M, Cout) output slab
    # TODO(synk): generate eps in-kernel with pltpu.prng_seed/stateful_normal to
    # drop this HBM read; kept explicit here for deterministic verification.
    eps2 = jnp.transpose(eps, (0, 2, 3, 1)).reshape(M, Cout)
    eps2 = jnp.pad(eps2, ((0, M_pad - M), (0, Cout_pad - Cout)))

    grid = (pl.cdiv(M_pad, tile_m),)

    cost = pl.CostEstimate(
        flops=4 * M_pad * K_pad * Cout_pad,                 # two matmuls
        transcendentals=M_pad * Cout_pad,                   # sqrt
        bytes_accessed=4 * (M_pad * K_pad                   # patches
                            + 2 * M_pad * Cout_pad          # eps + out
                            + 2 * K_pad * Cout_pad          # weights
                            + 2 * Cout_pad),                # biases
    )

    out = pl.pallas_call(
        _gauss_conv_lrt_kernel,
        out_shape=jax.ShapeDtypeStruct((M_pad, Cout_pad), jnp.float32),
        grid=grid,
        in_specs=[
            pl.BlockSpec((tile_m, K_pad), lambda i: (i, 0)),      # patches
            pl.BlockSpec((K_pad, Cout_pad), lambda i: (0, 0)),    # w_mu
            pl.BlockSpec((K_pad, Cout_pad), lambda i: (0, 0)),    # w_var
            pl.BlockSpec((1, Cout_pad), lambda i: (0, 0)),        # b_mu
            pl.BlockSpec((1, Cout_pad), lambda i: (0, 0)),        # b_var
            pl.BlockSpec((tile_m, Cout_pad), lambda i: (i, 0)),   # eps
        ],
        out_specs=pl.BlockSpec((tile_m, Cout_pad), lambda i: (i, 0)),
        compiler_params=pltpu.CompilerParams(
            dimension_semantics=("parallel",)),
        cost_estimate=cost,
    )(patches, w_mu, w_var, b_mu, b_var, eps2)

    # (M_pad, Cout_pad) -> slice valid region -> (N, OH, OW, Cout) -> NCHW
    out = out[:M, :Cout].reshape(N, OH, OW, Cout)
    return jnp.transpose(out, (0, 3, 1, 2))


def _reference(x, weight_mu, weight_sigma, bias_mu, bias_sigma, eps, var_type,
               stride=1, padding=0, dilation=1):
    """Pure-JAX reference of the torch forward (same eps), for verification."""
    dn = lax.conv_dimension_numbers(x.shape, weight_mu.shape,
                                    ("NCHW", "OIHW", "NCHW"))
    conv = functools.partial(
        lax.conv_general_dilated,
        window_strides=(stride, stride),
        padding=[(padding, padding), (padding, padding)],
        rhs_dilation=(dilation, dilation),
        dimension_numbers=dn)
    mean = conv(x, weight_mu) + bias_mu[None, :, None, None]
    if var_type == "exp":
        w_var, b_var = jnp.exp(weight_sigma), jnp.exp(bias_mu)
    else:
        w_var, b_var = weight_sigma ** 2, bias_sigma ** 2
    var = conv(x * x, w_var) + b_var[None, :, None, None]
    return mean + eps * jnp.sqrt(var)


if __name__ == "__main__":
    # Small shapes consistent with the module: batch=2, in_channels=4,
    # spatial=16x16, out_channels=8, kernel 3x3, stride=1, padding=0.
    N, C, H, W = 2, 4, 16, 16
    Cout, KH, KW = 8, 3, 3

    key = jax.random.PRNGKey(0)
    kx, kwm, kws, kbm, kbs, keps = jax.random.split(key, 6)

    k_std = sqrt(1.0 / (C * KH * KW))  # He-style init std from the module
    x = jax.random.normal(kx, (N, C, H, W), jnp.float32)
    weight_mu = k_std * jax.random.normal(kwm, (Cout, C, KH, KW), jnp.float32)
    weight_sigma = k_std * jax.random.normal(kws, (Cout, C, KH, KW), jnp.float32)
    bias_mu = k_std * jax.random.normal(kbm, (Cout,), jnp.float32)
    bias_sigma = k_std * jax.random.normal(kbs, (Cout,), jnp.float32)

    OH, OW = H - KH + 1, W - KW + 1
    eps = jax.random.normal(keps, (N, Cout, OH, OW), jnp.float32)

    for var_type in ("sq", "exp"):
        out = gaussian_conv2d_lrt(x, weight_mu, weight_sigma, bias_mu,
                                  bias_sigma, eps, var_type=var_type)
        out = jax.block_until_ready(out)
        ref = _reference(x, weight_mu, weight_sigma, bias_mu, bias_sigma, eps,
                         var_type)
        np.testing.assert_allclose(np.asarray(out), np.asarray(ref),
                                   rtol=1e-4, atol=1e-4)
        assert out.shape == (N, Cout, OH, OW)

    print("KERNEL_OK")
</pallas_src>

<mosaic_0001>
module attributes {stable_mosaic.version = 11 : i64} {
  func.func @_gauss_conv_lrt_kernel(%arg0: i32, %arg1: memref<256x128xf32, #tpu.memory_space<vmem>>, %arg2: memref<128x128xf32, #tpu.memory_space<vmem>>, %arg3: memref<128x128xf32, #tpu.memory_space<vmem>>, %arg4: memref<1x128xf32, #tpu.memory_space<vmem>>, %arg5: memref<1x128xf32, #tpu.memory_space<vmem>>, %arg6: memref<256x128xf32, #tpu.memory_space<vmem>>, %arg7: memref<256x128xf32, #tpu.memory_space<vmem>>) attributes {dimension_semantics = [#tpu.dimension_semantics<parallel>], iteration_bounds = array<i64: 2>, scalar_prefetch = 0 : i64, scratch_operands = 0 : i64, tpu.core_type = #tpu.core_type<tc>, window_params = [{transform_indices = @transform_0, window_bounds = array<i64: 256, 128>}, {pipeline_mode = #tpu.pipeline_mode<synchronous>, transform_indices = @transform_1, window_bounds = array<i64: 128, 128>}, {pipeline_mode = #tpu.pipeline_mode<synchronous>, transform_indices = @transform_2, window_bounds = array<i64: 128, 128>}, {pipeline_mode = #tpu.pipeline_mode<synchronous>, transform_indices = @transform_3, window_bounds = array<i64: 1, 128>}, {pipeline_mode = #tpu.pipeline_mode<synchronous>, transform_indices = @transform_4, window_bounds = array<i64: 1, 128>}, {transform_indices = @transform_5, window_bounds = array<i64: 256, 128>}, {transform_indices = @transform_6, window_bounds = array<i64: 256, 128>}]} {
    %c0 = arith.constant 0 : index
    %c0_0 = arith.constant 0 : index
    %0 = vector.load %arg1[%c0, %c0_0] : memref<256x128xf32, #tpu.memory_space<vmem>>, vector<256x128xf32>
    %c0_1 = arith.constant 0 : index
    %c0_2 = arith.constant 0 : index
    %1 = vector.load %arg2[%c0_1, %c0_2] : memref<128x128xf32, #tpu.memory_space<vmem>>, vector<128x128xf32>
    %cst = arith.constant dense<0.000000e+00> : vector<256x128xf32>
    %2 = tpu.matmul %0, %1, %cst {dimension_numbers = #tpu.dot_dimension_numbers<[1], [0], [0], [1], [0, 0, 1, 1], [], []>} : vector<256x128xf32>, vector<128x128xf32>, vector<256x128xf32> -> vector<256x128xf32>
    %c0_3 = arith.constant 0 : index
    %c0_4 = arith.constant 0 : index
    %3 = vector.load %arg4[%c0_3, %c0_4] : memref<1x128xf32, #tpu.memory_space<vmem>>, vector<1x128xf32>
    %4 = vector.broadcast %3 : vector<1x128xf32> to vector<256x128xf32>
    %5 = arith.addf %2, %4 : vector<256x128xf32>
    %6 = arith.mulf %0, %0 : vector<256x128xf32>
    %c0_5 = arith.constant 0 : index
    %c0_6 = arith.constant 0 : index
    %7 = vector.load %arg3[%c0_5, %c0_6] : memref<128x128xf32, #tpu.memory_space<vmem>>, vector<128x128xf32>
    %cst_7 = arith.constant dense<0.000000e+00> : vector<256x128xf32>
    %8 = tpu.matmul %6, %7, %cst_7 {dimension_numbers = #tpu.dot_dimension_numbers<[1], [0], [0], [1], [0, 0, 1, 1], [], []>} : vector<256x128xf32>, vector<128x128xf32>, vector<256x128xf32> -> vector<256x128xf32>
    %c0_8 = arith.constant 0 : index
    %c0_9 = arith.constant 0 : index
    %9 = vector.load %arg5[%c0_8, %c0_9] : memref<1x128xf32, #tpu.memory_space<vmem>>, vector<1x128xf32>
    %10 = vector.broadcast %9 : vector<1x128xf32> to vector<256x128xf32>
    %11 = arith.addf %8, %10 : vector<256x128xf32>
    %c0_10 = arith.constant 0 : index
    %c0_11 = arith.constant 0 : index
    %12 = vector.load %arg6[%c0_10, %c0_11] : memref<256x128xf32, #tpu.memory_space<vmem>>, vector<256x128xf32>
    %13 = math.sqrt %11 : vector<256x128xf32>
    %14 = arith.mulf %12, %13 : vector<256x128xf32>
    %15 = arith.addf %5, %14 : vector<256x128xf32>
    %c0_12 = arith.constant 0 : index
    %c0_13 = arith.constant 0 : index
    %16 = vector.load %arg7[%c0_12, %c0_13] : memref<256x128xf32, #tpu.memory_space<vmem>>, vector<256x128xf32>
    tpu.vector_store %arg7[%c0_12, %c0_13], %15 {strides = array<i32>} : memref<256x128xf32, #tpu.memory_space<vmem>>, vector<256x128xf32>,
    return
  }
  func.func @transform_0(%arg0: i32) -> (i32, i32) {
    %c0_i32 = arith.constant 0 : i32
    %c0_i32_0 = arith.constant 0 : i32
    return %arg0, %c0_i32 : i32, i32
  }
  func.func @transform_1(%arg0: i32) -> (i32, i32) {
    %c0_i32 = arith.constant 0 : i32
    %c0_i32_0 = arith.constant 0 : i32
    %c0_i32_1 = arith.constant 0 : i32
    return %c0_i32, %c0_i32_0 : i32, i32
  }
  func.func @transform_2(%arg0: i32) -> (i32, i32) {
    %c0_i32 = arith.constant 0 : i32
    %c0_i32_0 = arith.constant 0 : i32
    %c0_i32_1 = arith.constant 0 : i32
    return %c0_i32, %c0_i32_0 : i32, i32
  }
  func.func @transform_3(%arg0: i32) -> (i32, i32) {
    %c0_i32 = arith.constant 0 : i32
    %c0_i32_0 = arith.constant 0 : i32
    %c0_i32_1 = arith.constant 0 : i32
    return %c0_i32, %c0_i32_0 : i32, i32
  }
  func.func @transform_4(%arg0: i32) -> (i32, i32) {
    %c0_i32 = arith.constant 0 : i32
    %c0_i32_0 = arith.constant 0 : i32
    %c0_i32_1 = arith.constant 0 : i32
    return %c0_i32, %c0_i32_0 : i32, i32
  }
  func.func @transform_5(%arg0: i32) -> (i32, i32) {
    %c0_i32 = arith.constant 0 : i32
    %c0_i32_0 = arith.constant 0 : i32
    return %arg0, %c0_i32 : i32, i32
  }
  func.func @transform_6(%arg0: i32) -> (i32, i32) {
    %c0_i32 = arith.constant 0 : i32
    %c0_i32_0 = arith.constant 0 : i32
    return %arg0, %c0_i32 : i32, i32
  }
}

</mosaic_0001>

<llo_original>
// kernel: tpu_custom_call.1
$region0: #{tpu_custom_call.1}
  #allocation0 [shape = 'u32[]', space=smem, size = 0x4, offset = 0x4, fixed_abs, tag = 'smem constant byte address 0x4 - core index']
  #allocation1 [shape = 'u32[144,128]{1,0:T(1,128)}', space=vmem, size = 0x12000, scoped, tag = 'internal scratch']
  %s0 = inlined_call_operand.hbm [shape: f32[512,128], index: 0, kind: input, shape index: {}]
  %s1 = inlined_call_operand.hbm [shape: f32[128,128], index: 1, kind: input, shape index: {}]
  %s2 = inlined_call_operand.hbm [shape: f32[128,128], index: 2, kind: input, shape index: {}]
  %s3 = inlined_call_operand.vmem [shape: f32[1,128], index: 3, kind: input, shape index: {}]
  %s4 = inlined_call_operand.vmem [shape: f32[1,128], index: 4, kind: input, shape index: {}]
  %s5 = inlined_call_operand.hbm [shape: f32[512,128], index: 5, kind: input, shape index: {}]
  %s6 = inlined_call_operand.hbm [shape: f32[512,128], index: 6, kind: output, shape index: {}]
  %s7 = sld [smem:[#allocation0]]
  $region73: #{tpu_custom_call.1} parent=0
    _
  %s9 = ssub.s32 1, %s7
  %s10 = scalar_select 0, %s9, %s7
  $region1: #{tpu_custom_call.1} parent=0
    #allocation2 [shape = 'u8[262144]{0}', space=vmem, size = 0x40000, scoped, tag = 'input window, operand 0']
    #allocation3 [shape = 's32[2]{0}', space=sflag, size = 0x8, scoped, tag = 'scoped memory for tpu_custom_call.1']
    #allocation4 [shape = 's32[2]{0}', space=sflag, size = 0x8, scoped, tag = 'scoped memory for tpu_custom_call.1']
    #allocation5 [shape = 'u8[65536]{0}', space=vmem, size = 0x10000, scoped, tag = 'input window, operand 1, single buffered']
    #allocation6 [shape = 's32[1]{0}', space=sflag, size = 0x4, scoped, tag = 'scoped memory for tpu_custom_call.1']
    #allocation7 [shape = 'u8[65536]{0}', space=vmem, size = 0x10000, scoped, tag = 'input window, operand 2, single buffered']
    #allocation8 [shape = 'u8[262144]{0}', space=vmem, size = 0x40000, scoped, tag = 'input window, operand 5']
    #allocation9 [shape = 's32[2]{0}', space=sflag, size = 0x8, scoped, tag = 'scoped memory for tpu_custom_call.1']
    #allocation10 [shape = 'u8[262144]{0}', space=vmem, size = 0x40000, scoped, tag = 'output window, operand 0']
    %11 = vsyncpa [#allocation3], 0
    %s12 = scalar_lea.sflag [#allocation3], 1
    %13 = vsyncpa %s12, 0
    %14 = vsyncpa [#allocation6], 0
    %15 = vsyncpa [#allocation9], 0
    %s16 = scalar_lea.sflag [#allocation9], 1
    %17 = vsyncpa %s16, 0
    %18 = vsyncpa [#allocation4], 0
    %s19 = scalar_lea.sflag [#allocation4], 1
    %20 = vsyncpa %s19, 0
    loop: start=0, step=1, limit=4
    $region2: #{tpu_custom_call.1} parent=1 // loop_pre_header
      _
    $region3: #{tpu_custom_call.1} parent=1 // loop_header
      %s22 = sphi 0, %s26
      %p23 = scmp.ge.s32.totalorder %s22, 4
      %s32 = sphi 0, %s34
      %s35 = sphi 0, %s32
      %s36 = sphi 0, %s35
      %s52 = sphi 0, %s36
      %s56 = sphi 0, %s56
      %s58 = sphi 0, %s56
      %s59 = sphi 0, %s58
      %s73 = sphi 0, %s59
      %s77 = sphi 0, %s77
      %s79 = sphi 0, %s77
      %s80 = sphi 0, %s79
      %s94 = sphi 0, %s80
      %s98 = sphi 0, %s98
      %s100 = sphi 0, %s98
      %s101 = sphi 0, %s100
      %s115 = sphi 0, %s101
      %s119 = sphi 0, %s119
      %s121 = sphi 0, %s119
      %s122 = sphi 0, %s121
      %s136 = sphi 0, %s122
      %s142 = sphi 0, %s144
      %s145 = sphi 0, %s142
      %s146 = sphi 0, %s145
      %s162 = sphi 0, %s146
      %s168 = sphi 0, %s170
      %s171 = sphi 0, %s168
      %s172 = sphi 0, %s171
      %s188 = sphi 0, %s172
    $region4: #{tpu_custom_call.1} parent=1 // loop_header_branch
      %25 = sbr.rel (%p23) target = $region8
    $region5: #{tpu_custom_call.1} parent=1 // loop_body
      %s27 = ssub.s32 %s22, 1
      %s28 = ssub.s32 %s22, 2
      %s29 = sadd.s32 %s22, 1
      %s30 = ssub.s32 %s22, %s29
      %p31 = scmp.eq.s32.totalorder %s30, 0
      %s33 = sadd.s32 %s32, 1
      %s34 = scalar_select %p31, %s32, %s33
      %p37 = pneg %p31
      %p38 = scmp.eq.s32.totalorder %s22, 1
      %p39 = por %p37, %p38
      %p40 = scmp.ne.s32.totalorder %s32, %s35
      %p41 = scmp.eq.s32.totalorder %s22, 0
      %p42 = por %p40, %p41
      %p43 = scmp.ne.s32.totalorder %s32, %s35
      %p44 = scmp.eq.s32.totalorder %s27, 1
      %p45 = por %p43, %p44
      %p46 = scmp.ne.s32.totalorder %s35, %s36
      %p47 = scmp.eq.s32.totalorder %s27, 0
      %p48 = por %p46, %p47
      %p49 = scmp.ne.s32.totalorder %s35, %s36
      %p50 = scmp.eq.s32.totalorder %s28, 1
      %p51 = por %p49, %p50
      %p53 = scmp.ne.s32.totalorder %s36, %s52
      %p54 = scmp.eq.s32.totalorder %s28, 0
      %p55 = por %p53, %p54
      %s57 = sadd.s32 %s56, 1
      %p60 = scmp.eq.s32.totalorder %s22, 1
      %p61 = scmp.ne.s32.totalorder %s56, %s58
      %p62 = scmp.eq.s32.totalorder %s22, 0
      %p63 = por %p61, %p62
      %p64 = scmp.ne.s32.totalorder %s56, %s58
      %p65 = scmp.eq.s32.totalorder %s27, 1
      %p66 = por %p64, %p65
      %p67 = scmp.ne.s32.totalorder %s58, %s59
      %p68 = scmp.eq.s32.totalorder %s27, 0
      %p69 = por %p67, %p68
      %p70 = scmp.ne.s32.totalorder %s58, %s59
      %p71 = scmp.eq.s32.totalorder %s28, 1
      %p72 = por %p70, %p71
      %p74 = scmp.ne.s32.totalorder %s59, %s73
      %p75 = scmp.eq.s32.totalorder %s28, 0
      %p76 = por %p74, %p75
      %s78 = sadd.s32 %s77, 1
      %p81 = scmp.eq.s32.totalorder %s22, 1
      %p82 = scmp.ne.s32.totalorder %s77, %s79
      %p83 = scmp.eq.s32.totalorder %s22, 0
      %p84 = por %p82, %p83
      %p85 = scmp.ne.s32.totalorder %s77, %s79
      %p86 = scmp.eq.s32.totalorder %s27, 1
      %p87 = por %p85, %p86
      %p88 = scmp.ne.s32.totalorder %s79, %s80
      %p89 = scmp.eq.s32.totalorder %s27, 0
      %p90 = por %p88, %p89
      %p91 = scmp.ne.s32.totalorder %s79, %s80
      %p92 = scmp.eq.s32.totalorder %s28, 1
      %p93 = por %p91, %p92
      %p95 = scmp.ne.s32.totalorder %s80, %s94
      %p96 = scmp.eq.s32.totalorder %s28, 0
      %p97 = por %p95, %p96
      %s99 = sadd.s32 %s98, 1
      %p102 = scmp.eq.s32.totalorder %s22, 1
      %p103 = scmp.ne.s32.totalorder %s98, %s100
      %p104 = scmp.eq.s32.totalorder %s22, 0
      %p105 = por %p103, %p104
      %p106 = scmp.ne.s32.totalorder %s98, %s100
      %p107 = scmp.eq.s32.totalorder %s27, 1
      %p108 = por %p106, %p107
      %p109 = scmp.ne.s32.totalorder %s100, %s101
      %p110 = scmp.eq.s32.totalorder %s27, 0
      %p111 = por %p109, %p110
      %p112 = scmp.ne.s32.totalorder %s100, %s101
      %p113 = scmp.eq.s32.totalorder %s28, 1
      %p114 = por %p112, %p113
      %p116 = scmp.ne.s32.totalorder %s101, %s115
      %p117 = scmp.eq.s32.totalorder %s28, 0
      %p118 = por %p116, %p117
      %s120 = sadd.s32 %s119, 1
      %p123 = scmp.eq.s32.totalorder %s22, 1
      %p124 = scmp.ne.s32.totalorder %s119, %s121
      %p125 = scmp.eq.s32.totalorder %s22, 0
      %p126 = por %p124, %p125
      %p127 = scmp.ne.s32.totalorder %s119, %s121
      %p128 = scmp.eq.s32.totalorder %s27, 1
      %p129 = por %p127, %p128
      %p130 = scmp.ne.s32.totalorder %s121, %s122
      %p131 = scmp.eq.s32.totalorder %s27, 0
      %p132 = por %p130, %p131
      %p133 = scmp.ne.s32.totalorder %s121, %s122
      %p134 = scmp.eq.s32.totalorder %s28, 1
      %p135 = por %p133, %p134
      %p137 = scmp.ne.s32.totalorder %s122, %s136
      %p138 = scmp.eq.s32.totalorder %s28, 0
      %p139 = por %p137, %p138
      %s140 = ssub.s32 %s22, %s29
      %p141 = scmp.eq.s32.totalorder %s140, 0
      %s143 = sadd.s32 %s142, 1
      %s144 = scalar_select %p141, %s142, %s143
      %p147 = pneg %p141
      %p148 = scmp.eq.s32.totalorder %s22, 1
      %p149 = por %p147, %p148
      %p150 = scmp.ne.s32.totalorder %s142, %s145
      %p151 = scmp.eq.s32.totalorder %s22, 0
      %p152 = por %p150, %p151
      %p153 = scmp.ne.s32.totalorder %s142, %s145
      %p154 = scmp.eq.s32.totalorder %s27, 1
      %p155 = por %p153, %p154
      %p156 = scmp.ne.s32.totalorder %s145, %s146
      %p157 = scmp.eq.s32.totalorder %s27, 0
      %p158 = por %p156, %p157
      %p159 = scmp.ne.s32.totalorder %s145, %s146
      %p160 = scmp.eq.s32.totalorder %s28, 1
      %p161 = por %p159, %p160
      %p163 = scmp.ne.s32.totalorder %s146, %s162
      %p164 = scmp.eq.s32.totalorder %s28, 0
      %p165 = por %p163, %p164
      %s166 = ssub.s32 %s22, %s29
      %p167 = scmp.eq.s32.totalorder %s166, 0
      %s169 = sadd.s32 %s168, 1
      %s170 = scalar_select %p167, %s168, %s169
      %p173 = pneg %p167
      %p174 = scmp.eq.s32.totalorder %s22, 1
      %p175 = por %p173, %p174
      %p176 = scmp.ne.s32.totalorder %s168, %s171
      %p177 = scmp.eq.s32.totalorder %s22, 0
      %p178 = por %p176, %p177
      %p179 = scmp.ne.s32.totalorder %s168, %s171
      %p180 = scmp.eq.s32.totalorder %s27, 1
      %p181 = por %p179, %p180
      %p182 = scmp.ne.s32.totalorder %s171, %s172
      %p183 = scmp.eq.s32.totalorder %s27, 0
      %p184 = por %p182, %p183
      %p185 = scmp.ne.s32.totalorder %s171, %s172
      %p186 = scmp.eq.s32.totalorder %s28, 1
      %p187 = por %p185, %p186
      %p189 = scmp.ne.s32.totalorder %s172, %s188
      %p190 = scmp.eq.s32.totalorder %s28, 0
      %p191 = por %p189, %p190
      %p192 = scmp.le.s32.totalorder 1, %s22
      %p193 = scmp.lt.s32.totalorder %s22, 3
      %p194 = pnand %p192, %p193
      %p195 = pneg %p194
      // Predicated region
      $region9: #{tpu_custom_call.1} parent=5 // pred_check
        _
      $region10: #{tpu_custom_call.1} parent=5 // pred_check_branch
        %197 = sbr.rel (%p194) target = $region12
      $region11: #{tpu_custom_call.1} parent=5 // pred_region
        %s198 = ssub.s32 %s22, 1
        // Predicated region
        $region13: #{tpu_custom_call.1} parent=11 // pred_check
          %p199 = pneg %p69
        $region14: #{tpu_custom_call.1} parent=11 // pred_check_branch
          %201 = sbr.rel (%p199) target = $region16
        $region15: #{tpu_custom_call.1} parent=11 // pred_region
          %s203 = ssub.s32 2048, 2048
          %204 = vsyncadd [#allocation6], %s203
          %s205 = sshll.u32 [#allocation5], 4
          %s206 = int_to_ptr.vmem [resolvable:$true] %s205
          %211 = dma.hbm_to_vmem [thread:$0]  %s1, 2048, %s206, [#allocation6], 128, 128, 8
        $region16: #{tpu_custom_call.1} parent=11 // pred_fallthru
          _
        // Predicated region
        $region17: #{tpu_custom_call.1} parent=11 // pred_check
          %p212 = pneg %p90
        $region18: #{tpu_custom_call.1} parent=11 // pred_check_branch
          %214 = sbr.rel (%p212) target = $region20
        $region19: #{tpu_custom_call.1} parent=11 // pred_region
          %s216 = ssub.s32 2048, 2048
          %217 = vsyncadd [#allocation6], %s216
          %s218 = sshll.u32 [#allocation7], 4
          %s219 = int_to_ptr.vmem [resolvable:$true] %s218
          %224 = dma.hbm_to_vmem [thread:$0]  %s2, 2048, %s219, [#allocation6], 128, 128, 8
        $region20: #{tpu_custom_call.1} parent=11 // pred_fallthru
          _
        // Predicated region
        $region21: #{tpu_custom_call.1} parent=11 // pred_check
          %p225 = pneg %p111
        $region22: #{tpu_custom_call.1} parent=11 // pred_check_branch
          %227 = sbr.rel (%p225) target = $region24
        $region23: #{tpu_custom_call.1} parent=11 // pred_region
          _
        $region24: #{tpu_custom_call.1} parent=11 // pred_fallthru
          _
        // Predicated region
        $region25: #{tpu_custom_call.1} parent=11 // pred_check
          %p228 = pneg %p132
        $region26: #{tpu_custom_call.1} parent=11 // pred_check_branch
          %230 = sbr.rel (%p228) target = $region28
        $region27: #{tpu_custom_call.1} parent=11 // pred_region
          _
        $region28: #{tpu_custom_call.1} parent=11 // pred_fallthru
          _
      $region12: #{tpu_custom_call.1} parent=5 // pred_fallthru
        _
      %p231 = scmp.lt.s32.totalorder %s22, 2
      // Predicated region
      $region29: #{tpu_custom_call.1} parent=5 // pred_check
        %p232 = pneg %p231
      $region30: #{tpu_custom_call.1} parent=5 // pred_check_branch
        %234 = sbr.rel (%p232) target = $region32
      $region31: #{tpu_custom_call.1} parent=5 // pred_region
        // Predicated region
        $region33: #{tpu_custom_call.1} parent=31 // pred_check
          %p235 = pneg %p42
        $region34: #{tpu_custom_call.1} parent=31 // pred_check_branch
          %237 = sbr.rel (%p235) target = $region36
        $region35: #{tpu_custom_call.1} parent=31 // pred_region
          %s238 = sand.u32 %s32, 1
          %s239 = scalar_lea.sflag [#allocation3], %s238
          %s240 = sand.u32 %s32, 1
          %s241 = smul.addr %s240, 256
          %s242 = scalar_lea.vmem [#allocation2], %s241
          %s243 = smul.u32 32, %s22
          %s245 = ssub.s32 4096, 4096
          %246 = vsyncadd %s239, %s245
          %s247 = smul.addr %s243, 128
          %s248 = scalar_lea.hbm %s0, %s247
          %s249 = sshll.u32 %s242, 4
          %s250 = int_to_ptr.vmem [resolvable:$true] %s249
          %255 = dma.hbm_to_vmem [thread:$0]  %s248, 4096, %s250, %s239, 128, 128, 8
        $region36: #{tpu_custom_call.1} parent=31 // pred_fallthru
          _
        // Predicated region
        $region37: #{tpu_custom_call.1} parent=31 // pred_check
          %p256 = pneg %p152
        $region38: #{tpu_custom_call.1} parent=31 // pred_check_branch
          %258 = sbr.rel (%p256) target = $region40
        $region39: #{tpu_custom_call.1} parent=31 // pred_region
          %s259 = sand.u32 %s142, 1
          %s260 = scalar_lea.sflag [#allocation9], %s259
          %s261 = sand.u32 %s142, 1
          %s262 = smul.addr %s261, 256
          %s263 = scalar_lea.vmem [#allocation8], %s262
          %s264 = smul.u32 32, %s22
          %s266 = ssub.s32 4096, 4096
          %267 = vsyncadd %s260, %s266
          %s268 = smul.addr %s264, 128
          %s269 = scalar_lea.hbm %s5, %s268
          %s270 = sshll.u32 %s263, 4
          %s271 = int_to_ptr.vmem [resolvable:$true] %s270
          %276 = dma.hbm_to_vmem [thread:$0]  %s269, 4096, %s271, %s260, 128, 128, 8
        $region40: #{tpu_custom_call.1} parent=31 // pred_fallthru
          _
      $region32: #{tpu_custom_call.1} parent=5 // pred_fallthru
        _
      %p277 = scmp.le.s32.totalorder 1, %s22
      %p278 = scmp.lt.s32.totalorder %s22, 3
      %p279 = pnand %p277, %p278
      %p280 = pneg %p279
      // Predicated region
      $region41: #{tpu_custom_call.1} parent=5 // pred_check
        _
      $region42: #{tpu_custom_call.1} parent=5 // pred_check_branch
        %282 = sbr.rel (%p279) target = $region44
      $region43: #{tpu_custom_call.1} parent=5 // pred_region
        %s283 = ssub.s32 %s22, 1
        %s284 = sand.u32 %s35, 1
        %s285 = scalar_lea.sflag [#allocation3], %s284
        %s286 = sand.u32 %s35, 1
        %s287 = smul.addr %s286, 256
        %s288 = scalar_lea.vmem [#allocation2], %s287
        // Predicated region
        $region45: #{tpu_custom_call.1} parent=43 // pred_check
          %p289 = pneg %p48
        $region46: #{tpu_custom_call.1} parent=43 // pred_check_branch
          %291 = sbr.rel (%p289) target = $region48
        $region47: #{tpu_custom_call.1} parent=43 // pred_region
          %292 = dma.done %s285, 4096
        $region48: #{tpu_custom_call.1} parent=43 // pred_fallthru
          _
        // Predicated region
        $region49: #{tpu_custom_call.1} parent=43 // pred_check
          %p293 = pneg %p69
        $region50: #{tpu_custom_call.1} parent=43 // pred_check_branch
          %295 = sbr.rel (%p293) target = $region52
        $region51: #{tpu_custom_call.1} parent=43 // pred_region
          %296 = dma.done [#allocation6], 2048
        $region52: #{tpu_custom_call.1} parent=43 // pred_fallthru
          _
        // Predicated region
        $region53: #{tpu_custom_call.1} parent=43 // pred_check
          %p297 = pneg %p90
        $region54: #{tpu_custom_call.1} parent=43 // pred_check_branch
          %299 = sbr.rel (%p297) target = $region56
        $region55: #{tpu_custom_call.1} parent=43 // pred_region
          %300 = dma.done [#allocation6], 2048
        $region56: #{tpu_custom_call.1} parent=43 // pred_fallthru
          _
        %s301 = sand.u32 %s145, 1
        %s302 = scalar_lea.sflag [#allocation9], %s301
        %s303 = sand.u32 %s145, 1
        %s304 = smul.addr %s303, 256
        %s305 = scalar_lea.vmem [#allocation8], %s304
        // Predicated region
        $region57: #{tpu_custom_call.1} parent=43 // pred_check
          %p306 = pneg %p158
        $region58: #{tpu_custom_call.1} parent=43 // pred_check_branch
          %308 = sbr.rel (%p306) target = $region60
        $region59: #{tpu_custom_call.1} parent=43 // pred_region
          %309 = dma.done %s302, 4096
        $region60: #{tpu_custom_call.1} parent=43 // pred_fallthru
          _
        %s310 = sand.u32 %s35, 1
        %s311 = scalar_lea.sflag [#allocation3], %s310
        %s312 = sand.u32 %s35, 1
        %s313 = smul.addr %s312, 256
        %s314 = scalar_lea.vmem [#allocation2], %s313
        %p315 = pneg %p48
        %p316 = pneg %p45
        %p317 = pneg %p69
        %p318 = pneg %p66
        %p319 = pneg %p90
        %p320 = pneg %p87
        %p321 = pneg %p111
        %p322 = pneg %p108
        %p323 = pneg %p132
        %p324 = pneg %p129
        %s325 = sand.u32 %s145, 1
        %s326 = scalar_lea.sflag [#allocation9], %s325
        %s327 = sand.u32 %s145, 1
        %s328 = smul.addr %s327, 256
        %s329 = scalar_lea.vmem [#allocation8], %s328
        %p330 = pneg %p158
        %p331 = pneg %p155
        %p332 = pneg %p184
        %p333 = pneg %p181
        %s334 = sand.u32 %s171, 1
        %s335 = scalar_lea.sflag [#allocation4], %s334
        %s336 = sand.u32 %s171, 1
        %s337 = smul.addr %s336, 256
        %s338 = scalar_lea.vmem [#allocation10], %s337
        %s339 = smul.u32 32, %s27
        %s340 = smul.u32 32, %s27
        %s341 = smul.u32 32, %s27
        %v342 = vld [vmem:[%s288] sm:$0xff]
        %v343 = vld [vmem:[%s288 + $0x8] sm:$0xff]
        %v344 = vld [vmem:[%s288 + $0x10] sm:$0xff]
        %v345 = vld [vmem:[%s288 + $0x18] sm:$0xff]
        %v346 = vld [vmem:[%s288 + $0x20] sm:$0xff]
        %v347 = vld [vmem:[%s288 + $0x28] sm:$0xff]
        %v348 = vld [vmem:[%s288 + $0x30] sm:$0xff]
        %v349 = vld [vmem:[%s288 + $0x38] sm:$0xff]
        %v350 = vld [vmem:[%s288 + $0x40] sm:$0xff]
        %v351 = vld [vmem:[%s288 + $0x48] sm:$0xff]
        %v352 = vld [vmem:[%s288 + $0x50] sm:$0xff]
        %v353 = vld [vmem:[%s288 + $0x58] sm:$0xff]
        %v354 = vld [vmem:[%s288 + $0x60] sm:$0xff]
        %v355 = vld [vmem:[%s288 + $0x68] sm:$0xff]
        %v356 = vld [vmem:[%s288 + $0x70] sm:$0xff]
        %v357 = vld [vmem:[%s288 + $0x78] sm:$0xff]
        %v358 = vld [vmem:[%s288 + $0x80] sm:$0xff]
        %v359 = vld [vmem:[%s288 + $0x88] sm:$0xff]
        %v360 = vld [vmem:[%s288 + $0x90] sm:$0xff]
        %v361 = vld [vmem:[%s288 + $0x98] sm:$0xff]
        %v362 = vld [vmem:[%s288 + $0xa0] sm:$0xff]
        %v363 = vld [vmem:[%s288 + $0xa8] sm:$0xff]
        %v364 = vld [vmem:[%s288 + $0xb0] sm:$0xff]
        %v365 = vld [vmem:[%s288 + $0xb8] sm:$0xff]
        %v366 = vld [vmem:[%s288 + $0xc0] sm:$0xff]
        %v367 = vld [vmem:[%s288 + $0xc8] sm:$0xff]
        %v368 = vld [vmem:[%s288 + $0xd0] sm:$0xff]
        %v369 = vld [vmem:[%s288 + $0xd8] sm:$0xff]
        %v370 = vld [vmem:[%s288 + $0xe0] sm:$0xff]
        %v371 = vld [vmem:[%s288 + $0xe8] sm:$0xff]
        %v372 = vld [vmem:[%s288 + $0xf0] sm:$0xff]
        %v373 = vld [vmem:[%s288 + $0xf8] sm:$0xff]
        %v374 = vld [vmem:[#allocation5] sm:$0xff]
        %v375 = vld [vmem:[#allocation5 + $0x8] sm:$0xff]
        %v376 = vld [vmem:[#allocation5 + $0x10] sm:$0xff]
        %v377 = vld [vmem:[#allocation5 + $0x18] sm:$0xff]
        %v378 = vld [vmem:[#allocation5 + $0x20] sm:$0xff]
        %v379 = vld [vmem:[#allocation5 + $0x28] sm:$0xff]
        %v380 = vld [vmem:[#allocation5 + $0x30] sm:$0xff]
        %v381 = vld [vmem:[#allocation5 + $0x38] sm:$0xff]
        %v382 = vld [vmem:[#allocation5 + $0x40] sm:$0xff]
        %v383 = vld [vmem:[#allocation5 + $0x48] sm:$0xff]
        %v384 = vld [vmem:[#allocation5 + $0x50] sm:$0xff]
        %v385 = vld [vmem:[#allocation5 + $0x58] sm:$0xff]
        %v386 = vld [vmem:[#allocation5 + $0x60] sm:$0xff]
        %v387 = vld [vmem:[#allocation5 + $0x68] sm:$0xff]
        %v388 = vld [vmem:[#allocation5 + $0x70] sm:$0xff]
        %v389 = vld [vmem:[#allocation5 + $0x78] sm:$0xff]
        %v390 = vld [vmem:[%s3] sm:$0x1]
        %v392 = vlaneseq
        %v393 = vshrl.u32 %v392, 7
        %v394 = vsub.s32 0, %v393
        %v395 = vrot.slane %v390, %v394
        %397 = vmatprep.subr.mxu0 0.0
        %398 = vmatpush1.msra.mxu0 %v374
        %399 = vmatprep.subr.mxu0 0.0
        %400 = vmatpush1.msra.mxu0 %v375
        %401 = vmatprep.subr.mxu0 0.0
        %402 = vmatpush1.msra.mxu0 %v376
        %403 = vmatprep.subr.mxu0 0.0
        %404 = vmatpush1.msra.mxu0 %v377
        %405 = vmatprep.subr.mxu0 0.0
        %406 = vmatpush1.msra.mxu0 %v378
        %407 = vmatprep.subr.mxu0 0.0
        %408 = vmatpush1.msra.mxu0 %v379
        %409 = vmatprep.subr.mxu0 0.0
        %410 = vmatpush1.msra.mxu0 %v380
        %411 = vmatprep.subr.mxu0 0.0
        %412 = vmatpush1.msra.mxu0 %v381
        %413 = vmatprep.subr.mxu0 0.0
        %414 = vmatpush1.msra.mxu0 %v382
        %415 = vmatprep.subr.mxu0 0.0
        %416 = vmatpush1.msra.mxu0 %v383
        %417 = vmatprep.subr.mxu0 0.0
        %418 = vmatpush1.msra.mxu0 %v384
        %419 = vmatprep.subr.mxu0 0.0
        %420 = vmatpush1.msra.mxu0 %v385
        %421 = vmatprep.subr.mxu0 0.0
        %422 = vmatpush1.msra.mxu0 %v386
        %423 = vmatprep.subr.mxu0 0.0
        %424 = vmatpush1.msra.mxu0 %v387
        %425 = vmatprep.subr.mxu0 0.0
        %426 = vmatpush1.msra.mxu0 %v388
        %427 = vmatprep.subr.mxu0 0.0
        %428 = vmatpush1.msra.mxu0 %v389
        %429 = vmatprep.subr.mxu0 0.0
        %430 = vmatpush1.msra.mxu0 0.0
        %431 = vmatprep.subr.mxu0 0.0
        %432 = vmatpush1.msra.mxu0 0.0
        %433 = vmatprep.subr.mxu0 0.0
        %434 = vmatpush1.msra.mxu0 0.0
        %435 = vmatprep.subr.mxu0 0.0
        %436 = vmatpush1.msra.mxu0 0.0
        %437 = vmatprep.subr.mxu0 0.0
        %438 = vmatpush1.msra.mxu0 0.0
        %439 = vmatprep.subr.mxu0 0.0
        %440 = vmatpush1.msra.mxu0 0.0
        %441 = vmatprep.subr.mxu0 0.0
        %442 = vmatpush1.msra.mxu0 0.0
        %443 = vmatprep.subr.mxu0 0.0
        %444 = vmatpush1.msra.mxu0 0.0
        %445 = vmatprep.subr.mxu0 0.0
        %446 = vmatpush1.msra.mxu0 0.0
        %447 = vmatprep.subr.mxu0 0.0
        %448 = vmatpush1.msra.mxu0 0.0
        %449 = vmatprep.subr.mxu0 0.0
        %450 = vmatpush1.msra.mxu0 0.0
        %451 = vmatprep.subr.mxu0 0.0
        %452 = vmatpush1.msra.mxu0 0.0
        %453 = vmatprep.subr.mxu0 0.0
        %454 = vmatpush1.msra.mxu0 0.0
        %455 = vmatprep.subr.mxu0 0.0
        %456 = vmatpush1.msra.mxu0 0.0
        %457 = vmatprep.subr.mxu0 0.0
        %458 = vmatpush1.msra.mxu0 0.0
        %459 = vmatprep.subr.mxu0 0.0
        %460 = vmatpush1.msra.mxu0 0.0
        %461 = vmatprep.mubr.f32.mxu0 0.0
        %462 = vmatmul.mubr.f32.gmra.mrb[0].mxu0 %v342
        %v463 = vpop.f32.mrb[0].mxu0
        %v464 = vadd.f32 %v395, %v463
        %v465 = vpop.f32.mrb[0].mxu0
        %466 = vmatprep.mubr.f32.mxu0 0.0
        %467 = vmatmul.mubr.f32.gmra.mrb[0].mxu0 %v343
        %v468 = vpop.f32.mrb[0].mxu0
        %v469 = vadd.f32 %v395, %v468
        %v470 = vpop.f32.mrb[0].mxu0
        %471 = vmatprep.mubr.f32.mxu0 0.0
        %472 = vmatmul.mubr.f32.gmra.mrb[0].mxu0 %v344
        %v473 = vpop.f32.mrb[0].mxu0
        %v474 = vadd.f32 %v395, %v473
        %v475 = vpop.f32.mrb[0].mxu0
        %476 = vmatprep.mubr.f32.mxu0 0.0
        %477 = vmatmul.mubr.f32.gmra.mrb[0].mxu0 %v345
        %v478 = vpop.f32.mrb[0].mxu0
        %v479 = vadd.f32 %v395, %v478
        %v480 = vpop.f32.mrb[0].mxu0
        %481 = vmatprep.mubr.f32.mxu0 0.0
        %482 = vmatmul.mubr.f32.gmra.mrb[0].mxu0 %v346
        %v483 = vpop.f32.mrb[0].mxu0
        %v484 = vadd.f32 %v395, %v483
        %v485 = vpop.f32.mrb[0].mxu0
        %486 = vmatprep.mubr.f32.mxu0 0.0
        %487 = vmatmul.mubr.f32.gmra.mrb[0].mxu0 %v347
        %v488 = vpop.f32.mrb[0].mxu0
        %v489 = vadd.f32 %v395, %v488
        %v490 = vpop.f32.mrb[0].mxu0
        %491 = vmatprep.mubr.f32.mxu0 0.0
        %492 = vmatmul.mubr.f32.gmra.mrb[0].mxu0 %v348
        %v493 = vpop.f32.mrb[0].mxu0
        %v494 = vadd.f32 %v395, %v493
        %v495 = vpop.f32.mrb[0].mxu0
        %496 = vmatprep.mubr.f32.mxu0 0.0
        %497 = vmatmul.mubr.f32.gmra.mrb[0].mxu0 %v349
        %v498 = vpop.f32.mrb[0].mxu0
        %v499 = vadd.f32 %v395, %v498
        %v500 = vpop.f32.mrb[0].mxu0
        %501 = vmatprep.mubr.f32.mxu0 0.0
        %502 = vmatmul.mubr.f32.gmra.mrb[0].mxu0 %v350
        %v503 = vpop.f32.mrb[0].mxu0
        %v504 = vadd.f32 %v395, %v503
        %v505 = vpop.f32.mrb[0].mxu0
        %506 = vmatprep.mubr.f32.mxu0 0.0
        %507 = vmatmul.mubr.f32.gmra.mrb[0].mxu0 %v351
        %v508 = vpop.f32.mrb[0].mxu0
        %v509 = vadd.f32 %v395, %v508
        %v510 = vpop.f32.mrb[0].mxu0
        %511 = vmatprep.mubr.f32.mxu0 0.0
        %512 = vmatmul.mubr.f32.gmra.mrb[0].mxu0 %v352
        %v513 = vpop.f32.mrb[0].mxu0
        %v514 = vadd.f32 %v395, %v513
        %v515 = vpop.f32.mrb[0].mxu0
        %516 = vmatprep.mubr.f32.mxu0 0.0
        %517 = vmatmul.mubr.f32.gmra.mrb[0].mxu0 %v353
        %v518 = vpop.f32.mrb[0].mxu0
        %v519 = vadd.f32 %v395, %v518
        %v520 = vpop.f32.mrb[0].mxu0
        %521 = vmatprep.mubr.f32.mxu0 0.0
        %522 = vmatmul.mubr.f32.gmra.mrb[0].mxu0 %v354
        %v523 = vpop.f32.mrb[0].mxu0
        %v524 = vadd.f32 %v395, %v523
        %v525 = vpop.f32.mrb[0].mxu0
        %526 = vmatprep.mubr.f32.mxu0 0.0
        %527 = vmatmul.mubr.f32.gmra.mrb[0].mxu0 %v355
        %v528 = vpop.f32.mrb[0].mxu0
        %v529 = vadd.f32 %v395, %v528
        %v530 = vpop.f32.mrb[0].mxu0
        %531 = vmatprep.mubr.f32.mxu0 0.0
        %532 = vmatmul.mubr.f32.gmra.mrb[0].mxu0 %v356
        %v533 = vpop.f32.mrb[0].mxu0
        %v534 = vadd.f32 %v395, %v533
        %v535 = vpop.f32.mrb[0].mxu0
        %536 = vmatprep.mubr.f32.mxu0 0.0
        %537 = vmatmul.mubr.f32.gmra.mrb[0].mxu0 %v357
        %v538 = vpop.f32.mrb[0].mxu0
        %v539 = vadd.f32 %v395, %v538
        %v540 = vpop.f32.mrb[0].mxu0
        %541 = vmatprep.mubr.f32.mxu0 0.0
        %542 = vmatmul.mubr.f32.gmra.mrb[0].mxu0 %v358
        %v543 = vpop.f32.mrb[0].mxu0
        %v544 = vadd.f32 %v395, %v543
        %v545 = vpop.f32.mrb[0].mxu0
        %546 = vmatprep.mubr.f32.mxu0 0.0
        %547 = vmatmul.mubr.f32.gmra.mrb[0].mxu0 %v359
        %v548 = vpop.f32.mrb[0].mxu0
        %v549 = vadd.f32 %v395, %v548
        %v550 = vpop.f32.mrb[0].mxu0
        %551 = vmatprep.mubr.f32.mxu0 0.0
        %552 = vmatmul.mubr.f32.gmra.mrb[0].mxu0 %v360
        %v553 = vpop.f32.mrb[0].mxu0
        %v554 = vadd.f32 %v395, %v553
        %v555 = vpop.f32.mrb[0].mxu0
        %556 = vmatprep.mubr.f32.mxu0 0.0
        %557 = vmatmul.mubr.f32.gmra.mrb[0].mxu0 %v361
        %v558 = vpop.f32.mrb[0].mxu0
        %v559 = vadd.f32 %v395, %v558
        %v560 = vpop.f32.mrb[0].mxu0
        %561 = vmatprep.mubr.f32.mxu0 0.0
        %562 = vmatmul.mubr.f32.gmra.mrb[0].mxu0 %v362
        %v563 = vpop.f32.mrb[0].mxu0
        %v564 = vadd.f32 %v395, %v563
        %v565 = vpop.f32.mrb[0].mxu0
        %566 = vmatprep.mubr.f32.mxu0 0.0
        %567 = vmatmul.mubr.f32.gmra.mrb[0].mxu0 %v363
        %v568 = vpop.f32.mrb[0].mxu0
        %v569 = vadd.f32 %v395, %v568
        %v570 = vpop.f32.mrb[0].mxu0
        %571 = vmatprep.mubr.f32.mxu0 0.0
        %572 = vmatmul.mubr.f32.gmra.mrb[0].mxu0 %v364
        %v573 = vpop.f32.mrb[0].mxu0
        %v574 = vadd.f32 %v395, %v573
        %v575 = vpop.f32.mrb[0].mxu0
        %576 = vmatprep.mubr.f32.mxu0 0.0
        %577 = vmatmul.mubr.f32.gmra.mrb[0].mxu0 %v365
        %v578 = vpop.f32.mrb[0].mxu0
        %v579 = vadd.f32 %v395, %v578
        %v580 = vpop.f32.mrb[0].mxu0
        %581 = vmatprep.mubr.f32.mxu0 0.0
        %582 = vmatmul.mubr.f32.gmra.mrb[0].mxu0 %v366
        %v583 = vpop.f32.mrb[0].mxu0
        %v584 = vadd.f32 %v395, %v583
        %v585 = vpop.f32.mrb[0].mxu0
        %586 = vmatprep.mubr.f32.mxu0 0.0
        %587 = vmatmul.mubr.f32.gmra.mrb[0].mxu0 %v367
        %v588 = vpop.f32.mrb[0].mxu0
        %v589 = vadd.f32 %v395, %v588
        %v590 = vpop.f32.mrb[0].mxu0
        %591 = vmatprep.mubr.f32.mxu0 0.0
        %592 = vmatmul.mubr.f32.gmra.mrb[0].mxu0 %v368
        %v593 = vpop.f32.mrb[0].mxu0
        %v594 = vadd.f32 %v395, %v593
        %v595 = vpop.f32.mrb[0].mxu0
        %596 = vmatprep.mubr.f32.mxu0 0.0
        %597 = vmatmul.mubr.f32.gmra.mrb[0].mxu0 %v369
        %v598 = vpop.f32.mrb[0].mxu0
        %v599 = vadd.f32 %v395, %v598
        %v600 = vpop.f32.mrb[0].mxu0
        %601 = vmatprep.mubr.f32.mxu0 0.0
        %602 = vmatmul.mubr.f32.gmra.mrb[0].mxu0 %v370
        %v603 = vpop.f32.mrb[0].mxu0
        %v604 = vadd.f32 %v395, %v603
        %v605 = vpop.f32.mrb[0].mxu0
        %606 = vmatprep.mubr.f32.mxu0 0.0
        %607 = vmatmul.mubr.f32.gmra.mrb[0].mxu0 %v371
        %v608 = vpop.f32.mrb[0].mxu0
        %v609 = vadd.f32 %v395, %v608
        %v610 = vpop.f32.mrb[0].mxu0
        %611 = vmatprep.mubr.f32.mxu0 0.0
        %612 = vmatmul.mubr.f32.gmra.mrb[0].mxu0 %v372
        %v613 = vpop.f32.mrb[0].mxu0
        %v614 = vadd.f32 %v395, %v613
        %v615 = vpop.f32.mrb[0].mxu0
        %616 = vmatprep.mubr.f32.mxu0 0.0
        %617 = vmatmul.mubr.f32.gmra.mrb[0].mxu0 %v373
        %v618 = vpop.f32.mrb[0].mxu0
        %v619 = vadd.f32 %v395, %v618
        %v620 = vpop.f32.mrb[0].mxu0
        %621 = vdwg.mxu0
        %v622 = vmul.f32 %v342, %v342
        %v623 = vmul.f32 %v343, %v343
        %v624 = vmul.f32 %v344, %v344
        %v625 = vmul.f32 %v345, %v345
        %v626 = vmul.f32 %v346, %v346
        %v627 = vmul.f32 %v347, %v347
        %v628 = vmul.f32 %v348, %v348
        %v629 = vmul.f32 %v349, %v349
        %v630 = vmul.f32 %v350, %v350
        %v631 = vmul.f32 %v351, %v351
        %v632 = vmul.f32 %v352, %v352
        %v633 = vmul.f32 %v353, %v353
        %v634 = vmul.f32 %v354, %v354
        %v635 = vmul.f32 %v355, %v355
        %v636 = vmul.f32 %v356, %v356
        %v637 = vmul.f32 %v357, %v357
        %v638 = vmul.f32 %v358, %v358
        %v639 = vmul.f32 %v359, %v359
        %v640 = vmul.f32 %v360, %v360
        %v641 = vmul.f32 %v361, %v361
        %v642 = vmul.f32 %v362, %v362
        %v643 = vmul.f32 %v363, %v363
        %v644 = vmul.f32 %v364, %v364
        %v645 = vmul.f32 %v365, %v365
        %v646 = vmul.f32 %v366, %v366
        %v647 = vmul.f32 %v367, %v367
        %v648 = vmul.f32 %v368, %v368
        %v649 = vmul.f32 %v369, %v369
        %v650 = vmul.f32 %v370, %v370
        %v651 = vmul.f32 %v371, %v371
        %v652 = vmul.f32 %v372, %v372
        %v653 = vmul.f32 %v373, %v373
        %v654 = vld [vmem:[#allocation7] sm:$0xff]
        %v655 = vld [vmem:[#allocation7 + $0x8] sm:$0xff]
        %v656 = vld [vmem:[#allocation7 + $0x10] sm:$0xff]
        %v657 = vld [vmem:[#allocation7 + $0x18] sm:$0xff]
        %v658 = vld [vmem:[#allocation7 + $0x20] sm:$0xff]
        %v659 = vld [vmem:[#allocation7 + $0x28] sm:$0xff]
        %v660 = vld [vmem:[#allocation7 + $0x30] sm:$0xff]
        %v661 = vld [vmem:[#allocation7 + $0x38] sm:$0xff]
        %v662 = vld [vmem:[#allocation7 + $0x40] sm:$0xff]
        %v663 = vld [vmem:[#allocation7 + $0x48] sm:$0xff]
        %v664 = vld [vmem:[#allocation7 + $0x50] sm:$0xff]
        %v665 = vld [vmem:[#allocation7 + $0x58] sm:$0xff]
        %v666 = vld [vmem:[#allocation7 + $0x60] sm:$0xff]
        %v667 = vld [vmem:[#allocation7 + $0x68] sm:$0xff]
        %v668 = vld [vmem:[#allocation7 + $0x70] sm:$0xff]
        %v669 = vld [vmem:[#allocation7 + $0x78] sm:$0xff]
        %v670 = vld [vmem:[%s4] sm:$0x1]
        %v672 = vlaneseq
        %v673 = vshrl.u32 %v672, 7
        %v674 = vsub.s32 0, %v673
        %v675 = vrot.slane %v670, %v674
        %677 = vmatprep.subr.mxu0 0.0
        %678 = vmatpush1.msra.mxu0 %v654
        %679 = vmatprep.subr.mxu0 0.0
        %680 = vmatpush1.msra.mxu0 %v655
        %681 = vmatprep.subr.mxu0 0.0
        %682 = vmatpush1.msra.mxu0 %v656
        %683 = vmatprep.subr.mxu0 0.0
        %684 = vmatpush1.msra.mxu0 %v657
        %685 = vmatprep.subr.mxu0 0.0
        %686 = vmatpush1.msra.mxu0 %v658
        %687 = vmatprep.subr.mxu0 0.0
        %688 = vmatpush1.msra.mxu0 %v659
        %689 = vmatprep.subr.mxu0 0.0
        %690 = vmatpush1.msra.mxu0 %v660
        %691 = vmatprep.subr.mxu0 0.0
        %692 = vmatpush1.msra.mxu0 %v661
        %693 = vmatprep.subr.mxu0 0.0
        %694 = vmatpush1.msra.mxu0 %v662
        %695 = vmatprep.subr.mxu0 0.0
        %696 = vmatpush1.msra.mxu0 %v663
        %697 = vmatprep.subr.mxu0 0.0
        %698 = vmatpush1.msra.mxu0 %v664
        %699 = vmatprep.subr.mxu0 0.0
        %700 = vmatpush1.msra.mxu0 %v665
        %701 = vmatprep.subr.mxu0 0.0
        %702 = vmatpush1.msra.mxu0 %v666
        %703 = vmatprep.subr.mxu0 0.0
        %704 = vmatpush1.msra.mxu0 %v667
        %705 = vmatprep.subr.mxu0 0.0
        %706 = vmatpush1.msra.mxu0 %v668
        %707 = vmatprep.subr.mxu0 0.0
        %708 = vmatpush1.msra.mxu0 %v669
        %709 = vmatprep.subr.mxu0 0.0
        %710 = vmatpush1.msra.mxu0 0.0
        %711 = vmatprep.subr.mxu0 0.0
        %712 = vmatpush1.msra.mxu0 0.0
        %713 = vmatprep.subr.mxu0 0.0
        %714 = vmatpush1.msra.mxu0 0.0
        %715 = vmatprep.subr.mxu0 0.0
        %716 = vmatpush1.msra.mxu0 0.0
        %717 = vmatprep.subr.mxu0 0.0
        %718 = vmatpush1.msra.mxu0 0.0
        %719 = vmatprep.subr.mxu0 0.0
        %720 = vmatpush1.msra.mxu0 0.0
        %721 = vmatprep.subr.mxu0 0.0
        %722 = vmatpush1.msra.mxu0 0.0
        %723 = vmatprep.subr.mxu0 0.0
        %724 = vmatpush1.msra.mxu0 0.0
        %725 = vmatprep.subr.mxu0 0.0
        %726 = vmatpush1.msra.mxu0 0.0
        %727 = vmatprep.subr.mxu0 0.0
        %728 = vmatpush1.msra.mxu0 0.0
        %729 = vmatprep.subr.mxu0 0.0
        %730 = vmatpush1.msra.mxu0 0.0
        %731 = vmatprep.subr.mxu0 0.0
        %732 = vmatpush1.msra.mxu0 0.0
        %733 = vmatprep.subr.mxu0 0.0
        %734 = vmatpush1.msra.mxu0 0.0
        %735 = vmatprep.subr.mxu0 0.0
        %736 = vmatpush1.msra.mxu0 0.0
        %737 = vmatprep.subr.mxu0 0.0
        %738 = vmatpush1.msra.mxu0 0.0
        %739 = vmatprep.subr.mxu0 0.0
        %740 = vmatpush1.msra.mxu0 0.0
        %741 = vmatprep.mubr.f32.mxu0 0.0
        %742 = vmatmul.mubr.f32.gmra.mrb[0].mxu0 %v622
        %v743 = vpop.f32.mrb[0].mxu0
        %v744 = vadd.f32 %v675, %v743
        %v745 = vpop.f32.mrb[0].mxu0
        %746 = vmatprep.mubr.f32.mxu0 0.0
        %747 = vmatmul.mubr.f32.gmra.mrb[0].mxu0 %v623
        %v748 = vpop.f32.mrb[0].mxu0
        %v749 = vadd.f32 %v675, %v748
        %v750 = vpop.f32.mrb[0].mxu0
        %751 = vmatprep.mubr.f32.mxu0 0.0
        %752 = vmatmul.mubr.f32.gmra.mrb[0].mxu0 %v624
        %v753 = vpop.f32.mrb[0].mxu0
        %v754 = vadd.f32 %v675, %v753
        %v755 = vpop.f32.mrb[0].mxu0
        %756 = vmatprep.mubr.f32.mxu0 0.0
        %757 = vmatmul.mubr.f32.gmra.mrb[0].mxu0 %v625
        %v758 = vpop.f32.mrb[0].mxu0
        %v759 = vadd.f32 %v675, %v758
        %v760 = vpop.f32.mrb[0].mxu0
        %761 = vmatprep.mubr.f32.mxu0 0.0
        %762 = vmatmul.mubr.f32.gmra.mrb[0].mxu0 %v626
        %v763 = vpop.f32.mrb[0].mxu0
        %v764 = vadd.f32 %v675, %v763
        %v765 = vpop.f32.mrb[0].mxu0
        %766 = vmatprep.mubr.f32.mxu0 0.0
        %767 = vmatmul.mubr.f32.gmra.mrb[0].mxu0 %v627
        %v768 = vpop.f32.mrb[0].mxu0
        %v769 = vadd.f32 %v675, %v768
        %v770 = vpop.f32.mrb[0].mxu0
        %771 = vmatprep.mubr.f32.mxu0 0.0
        %772 = vmatmul.mubr.f32.gmra.mrb[0].mxu0 %v628
        %v773 = vpop.f32.mrb[0].mxu0
        %v774 = vadd.f32 %v675, %v773
        %v775 = vpop.f32.mrb[0].mxu0
        %776 = vmatprep.mubr.f32.mxu0 0.0
        %777 = vmatmul.mubr.f32.gmra.mrb[0].mxu0 %v629
        %v778 = vpop.f32.mrb[0].mxu0
        %v779 = vadd.f32 %v675, %v778
        %v780 = vpop.f32.mrb[0].mxu0
        %781 = vmatprep.mubr.f32.mxu0 0.0
        %782 = vmatmul.mubr.f32.gmra.mrb[0].mxu0 %v630
        %v783 = vpop.f32.mrb[0].mxu0
        %v784 = vadd.f32 %v675, %v783
        %v785 = vpop.f32.mrb[0].mxu0
        %786 = vmatprep.mubr.f32.mxu0 0.0
        %787 = vmatmul.mubr.f32.gmra.mrb[0].mxu0 %v631
        %v788 = vpop.f32.mrb[0].mxu0
        %v789 = vadd.f32 %v675, %v788
        %v790 = vpop.f32.mrb[0].mxu0
        %791 = vmatprep.mubr.f32.mxu0 0.0
        %792 = vmatmul.mubr.f32.gmra.mrb[0].mxu0 %v632
        %v793 = vpop.f32.mrb[0].mxu0
        %v794 = vadd.f32 %v675, %v793
        %v795 = vpop.f32.mrb[0].mxu0
        %796 = vmatprep.mubr.f32.mxu0 0.0
        %797 = vmatmul.mubr.f32.gmra.mrb[0].mxu0 %v633
        %v798 = vpop.f32.mrb[0].mxu0
        %v799 = vadd.f32 %v675, %v798
        %v800 = vpop.f32.mrb[0].mxu0
        %801 = vmatprep.mubr.f32.mxu0 0.0
        %802 = vmatmul.mubr.f32.gmra.mrb[0].mxu0 %v634
        %v803 = vpop.f32.mrb[0].mxu0
        %v804 = vadd.f32 %v675, %v803
        %v805 = vpop.f32.mrb[0].mxu0
        %806 = vmatprep.mubr.f32.mxu0 0.0
        %807 = vmatmul.mubr.f32.gmra.mrb[0].mxu0 %v635
        %v808 = vpop.f32.mrb[0].mxu0
        %v809 = vadd.f32 %v675, %v808
        %v810 = vpop.f32.mrb[0].mxu0
        %811 = vmatprep.mubr.f32.mxu0 0.0
        %812 = vmatmul.mubr.f32.gmra.mrb[0].mxu0 %v636
        %v813 = vpop.f32.mrb[0].mxu0
        %v814 = vadd.f32 %v675, %v813
        %v815 = vpop.f32.mrb[0].mxu0
        %816 = vmatprep.mubr.f32.mxu0 0.0
        %817 = vmatmul.mubr.f32.gmra.mrb[0].mxu0 %v637
        %v818 = vpop.f32.mrb[0].mxu0
        %v819 = vadd.f32 %v675, %v818
        %v820 = vpop.f32.mrb[0].mxu0
        %821 = vmatprep.mubr.f32.mxu0 0.0
        %822 = vmatmul.mubr.f32.gmra.mrb[0].mxu0 %v638
        %v823 = vpop.f32.mrb[0].mxu0
        %v824 = vadd.f32 %v675, %v823
        %v825 = vpop.f32.mrb[0].mxu0
        %826 = vmatprep.mubr.f32.mxu0 0.0
        %827 = vmatmul.mubr.f32.gmra.mrb[0].mxu0 %v639
        %v828 = vpop.f32.mrb[0].mxu0
        %v829 = vadd.f32 %v675, %v828
        %v830 = vpop.f32.mrb[0].mxu0
        %831 = vmatprep.mubr.f32.mxu0 0.0
        %832 = vmatmul.mubr.f32.gmra.mrb[0].mxu0 %v640
        %v833 = vpop.f32.mrb[0].mxu0
        %v834 = vadd.f32 %v675, %v833
        %v835 = vpop.f32.mrb[0].mxu0
        %836 = vmatprep.mubr.f32.mxu0 0.0
        %837 = vmatmul.mubr.f32.gmra.mrb[0].mxu0 %v641
        %v838 = vpop.f32.mrb[0].mxu0
        %v839 = vadd.f32 %v675, %v838
        %v840 = vpop.f32.mrb[0].mxu0
        %841 = vmatprep.mubr.f32.mxu0 0.0
        %842 = vmatmul.mubr.f32.gmra.mrb[0].mxu0 %v642
        %v843 = vpop.f32.mrb[0].mxu0
        %v844 = vadd.f32 %v675, %v843
        %v845 = vpop.f32.mrb[0].mxu0
        %846 = vmatprep.mubr.f32.mxu0 0.0
        %847 = vmatmul.mubr.f32.gmra.mrb[0].mxu0 %v643
        %v848 = vpop.f32.mrb[0].mxu0
        %v849 = vadd.f32 %v675, %v848
        %v850 = vpop.f32.mrb[0].mxu0
        %851 = vmatprep.mubr.f32.mxu0 0.0
        %852 = vmatmul.mubr.f32.gmra.mrb[0].mxu0 %v644
        %v853 = vpop.f32.mrb[0].mxu0
        %v854 = vadd.f32 %v675, %v853
        %v855 = vpop.f32.mrb[0].mxu0
        %856 = vmatprep.mubr.f32.mxu0 0.0
        %857 = vmatmul.mubr.f32.gmra.mrb[0].mxu0 %v645
        %v858 = vpop.f32.mrb[0].mxu0
        %v859 = vadd.f32 %v675, %v858
        %v860 = vpop.f32.mrb[0].mxu0
        %861 = vmatprep.mubr.f32.mxu0 0.0
        %862 = vmatmul.mubr.f32.gmra.mrb[0].mxu0 %v646
        %v863 = vpop.f32.mrb[0].mxu0
        %v864 = vadd.f32 %v675, %v863
        %v865 = vpop.f32.mrb[0].mxu0
        %866 = vmatprep.mubr.f32.mxu0 0.0
        %867 = vmatmul.mubr.f32.gmra.mrb[0].mxu0 %v647
        %v868 = vpop.f32.mrb[0].mxu0
        %v869 = vadd.f32 %v675, %v868
        %v870 = vpop.f32.mrb[0].mxu0
        %871 = vmatprep.mubr.f32.mxu0 0.0
        %872 = vmatmul.mubr.f32.gmra.mrb[0].mxu0 %v648
        %v873 = vpop.f32.mrb[0].mxu0
        %v874 = vadd.f32 %v675, %v873
        %v875 = vpop.f32.mrb[0].mxu0
        %876 = vmatprep.mubr.f32.mxu0 0.0
        %877 = vmatmul.mubr.f32.gmra.mrb[0].mxu0 %v649
        %v878 = vpop.f32.mrb[0].mxu0
        %v879 = vadd.f32 %v675, %v878
        %v880 = vpop.f32.mrb[0].mxu0
        %881 = vmatprep.mubr.f32.mxu0 0.0
        %882 = vmatmul.mubr.f32.gmra.mrb[0].mxu0 %v650
        %v883 = vpop.f32.mrb[0].mxu0
        %v884 = vadd.f32 %v675, %v883
        %v885 = vpop.f32.mrb[0].mxu0
        %886 = vmatprep.mubr.f32.mxu0 0.0
        %887 = vmatmul.mubr.f32.gmra.mrb[0].mxu0 %v651
        %v888 = vpop.f32.mrb[0].mxu0
        %v889 = vadd.f32 %v675, %v888
        %v890 = vpop.f32.mrb[0].mxu0
        %891 = vmatprep.mubr.f32.mxu0 0.0
        %892 = vmatmul.mubr.f32.gmra.mrb[0].mxu0 %v652
        %v893 = vpop.f32.mrb[0].mxu0
        %v894 = vadd.f32 %v675, %v893
        %v895 = vpop.f32.mrb[0].mxu0
        %896 = vmatprep.mubr.f32.mxu0 0.0
        %897 = vmatmul.mubr.f32.gmra.mrb[0].mxu0 %v653
        %v898 = vpop.f32.mrb[0].mxu0
        %v899 = vadd.f32 %v675, %v898
        %v900 = vpop.f32.mrb[0].mxu0
        %901 = vdwg.mxu0
        %v902 = vld [vmem:[%s305] sm:$0xff]
        %v903 = vld [vmem:[%s305 + $0x8] sm:$0xff]
        %v904 = vld [vmem:[%s305 + $0x10] sm:$0xff]
        %v905 = vld [vmem:[%s305 + $0x18] sm:$0xff]
        %v906 = vld [vmem:[%s305 + $0x20] sm:$0xff]
        %v907 = vld [vmem:[%s305 + $0x28] sm:$0xff]
        %v908 = vld [vmem:[%s305 + $0x30] sm:$0xff]
        %v909 = vld [vmem:[%s305 + $0x38] sm:$0xff]
        %v910 = vld [vmem:[%s305 + $0x40] sm:$0xff]
        %v911 = vld [vmem:[%s305 + $0x48] sm:$0xff]
        %v912 = vld [vmem:[%s305 + $0x50] sm:$0xff]
        %v913 = vld [vmem:[%s305 + $0x58] sm:$0xff]
        %v914 = vld [vmem:[%s305 + $0x60] sm:$0xff]
        %v915 = vld [vmem:[%s305 + $0x68] sm:$0xff]
        %v916 = vld [vmem:[%s305 + $0x70] sm:$0xff]
        %v917 = vld [vmem:[%s305 + $0x78] sm:$0xff]
        %v918 = vld [vmem:[%s305 + $0x80] sm:$0xff]
        %v919 = vld [vmem:[%s305 + $0x88] sm:$0xff]
        %v920 = vld [vmem:[%s305 + $0x90] sm:$0xff]
        %v921 = vld [vmem:[%s305 + $0x98] sm:$0xff]
        %v922 = vld [vmem:[%s305 + $0xa0] sm:$0xff]
        %v923 = vld [vmem:[%s305 + $0xa8] sm:$0xff]
        %v924 = vld [vmem:[%s305 + $0xb0] sm:$0xff]
        %v925 = vld [vmem:[%s305 + $0xb8] sm:$0xff]
        %v926 = vld [vmem:[%s305 + $0xc0] sm:$0xff]
        %v927 = vld [vmem:[%s305 + $0xc8] sm:$0xff]
        %v928 = vld [vmem:[%s305 + $0xd0] sm:$0xff]
        %v929 = vld [vmem:[%s305 + $0xd8] sm:$0xff]
        %v930 = vld [vmem:[%s305 + $0xe0] sm:$0xff]
        %v931 = vld [vmem:[%s305 + $0xe8] sm:$0xff]
        %v932 = vld [vmem:[%s305 + $0xf0] sm:$0xff]
        %v933 = vld [vmem:[%s305 + $0xf8] sm:$0xff]
        %v934 = vrsqrt.pop %v744
        %v935 = vmul.f32 %v744, %v934
        %vm936 = vcmp.eq.f32.partialorder %v744, inf
        %v937 = vsel %vm936, %v744, %v935
        %vm938 = vcmp.eq.f32.partialorder %v744, 0.0
        %v939 = vand.u32 %v744, 2147483648
        %v940 = vsel %vm938, %v939, %v937
        %v941 = vrsqrt.pop %v749
        %v942 = vmul.f32 %v749, %v941
        %vm943 = vcmp.eq.f32.partialorder %v749, inf
        %v944 = vsel %vm943, %v749, %v942
        %vm945 = vcmp.eq.f32.partialorder %v749, 0.0
        %v946 = vand.u32 %v749, 2147483648
        %v947 = vsel %vm945, %v946, %v944
        %v948 = vrsqrt.pop %v754
        %v949 = vmul.f32 %v754, %v948
        %vm950 = vcmp.eq.f32.partialorder %v754, inf
        %v951 = vsel %vm950, %v754, %v949
        %vm952 = vcmp.eq.f32.partialorder %v754, 0.0
        %v953 = vand.u32 %v754, 2147483648
        %v954 = vsel %vm952, %v953, %v951
        %v955 = vrsqrt.pop %v759
        %v956 = vmul.f32 %v759, %v955
        %vm957 = vcmp.eq.f32.partialorder %v759, inf
        %v958 = vsel %vm957, %v759, %v956
        %vm959 = vcmp.eq.f32.partialorder %v759, 0.0
        %v960 = vand.u32 %v759, 2147483648
        %v961 = vsel %vm959, %v960, %v958
        %v962 = vrsqrt.pop %v764
        %v963 = vmul.f32 %v764, %v962
        %vm964 = vcmp.eq.f32.partialorder %v764, inf
        %v965 = vsel %vm964, %v764, %v963
        %vm966 = vcmp.eq.f32.partialorder %v764, 0.0
        %v967 = vand.u32 %v764, 2147483648
        %v968 = vsel %vm966, %v967, %v965
        %v969 = vrsqrt.pop %v769
        %v970 = vmul.f32 %v769, %v969
        %vm971 = vcmp.eq.f32.partialorder %v769, inf
        %v972 = vsel %vm971, %v769, %v970
        %vm973 = vcmp.eq.f32.partialorder %v769, 0.0
        %v974 = vand.u32 %v769, 2147483648
        %v975 = vsel %vm973, %v974, %v972
        %v976 = vrsqrt.pop %v774
        %v977 = vmul.f32 %v774, %v976
        %vm978 = vcmp.eq.f32.partialorder %v774, inf
        %v979 = vsel %vm978, %v774, %v977
        %vm980 = vcmp.eq.f32.partialorder %v774, 0.0
        %v981 = vand.u32 %v774, 2147483648
        %v982 = vsel %vm980, %v981, %v979
        %v983 = vrsqrt.pop %v779
        %v984 = vmul.f32 %v779, %v983
        %vm985 = vcmp.eq.f32.partialorder %v779, inf
        %v986 = vsel %vm985, %v779, %v984
        %vm987 = vcmp.eq.f32.partialorder %v779, 0.0
        %v988 = vand.u32 %v779, 2147483648
        %v989 = vsel %vm987, %v988, %v986
        %v990 = vrsqrt.pop %v784
        %v991 = vmul.f32 %v784, %v990
        %vm992 = vcmp.eq.f32.partialorder %v784, inf
        %v993 = vsel %vm992, %v784, %v991
        %vm994 = vcmp.eq.f32.partialorder %v784, 0.0
        %v995 = vand.u32 %v784, 2147483648
        %v996 = vsel %vm994, %v995, %v993
        %v997 = vrsqrt.pop %v789
        %v998 = vmul.f32 %v789, %v997
        %vm999 = vcmp.eq.f32.partialorder %v789, inf
        %v1000 = vsel %vm999, %v789, %v998
        %vm1001 = vcmp.eq.f32.partialorder %v789, 0.0
        %v1002 = vand.u32 %v789, 2147483648
        %v1003 = vsel %vm1001, %v1002, %v1000
        %v1004 = vrsqrt.pop %v794
        %v1005 = vmul.f32 %v794, %v1004
        %vm1006 = vcmp.eq.f32.partialorder %v794, inf
        %v1007 = vsel %vm1006, %v794, %v1005
        %vm1008 = vcmp.eq.f32.partialorder %v794, 0.0
        %v1009 = vand.u32 %v794, 2147483648
        %v1010 = vsel %vm1008, %v1009, %v1007
        %v1011 = vrsqrt.pop %v799
        %v1012 = vmul.f32 %v799, %v1011
        %vm1013 = vcmp.eq.f32.partialorder %v799, inf
        %v1014 = vsel %vm1013, %v799, %v1012
        %vm1015 = vcmp.eq.f32.partialorder %v799, 0.0
        %v1016 = vand.u32 %v799, 2147483648
        %v1017 = vsel %vm1015, %v1016, %v1014
        %v1018 = vrsqrt.pop %v804
        %v1019 = vmul.f32 %v804, %v1018
        %vm1020 = vcmp.eq.f32.partialorder %v804, inf
        %v1021 = vsel %vm1020, %v804, %v1019
        %vm1022 = vcmp.eq.f32.partialorder %v804, 0.0
        %v1023 = vand.u32 %v804, 2147483648
        %v1024 = vsel %vm1022, %v1023, %v1021
        %v1025 = vrsqrt.pop %v809
        %v1026 = vmul.f32 %v809, %v1025
        %vm1027 = vcmp.eq.f32.partialorder %v809, inf
        %v1028 = vsel %vm1027, %v809, %v1026
        %vm1029 = vcmp.eq.f32.partialorder %v809, 0.0
        %v1030 = vand.u32 %v809, 2147483648
        %v1031 = vsel %vm1029, %v1030, %v1028
        %v1032 = vrsqrt.pop %v814
        %v1033 = vmul.f32 %v814, %v1032
        %vm1034 = vcmp.eq.f32.partialorder %v814, inf
        %v1035 = vsel %vm1034, %v814, %v1033
        %vm1036 = vcmp.eq.f32.partialorder %v814, 0.0
        %v1037 = vand.u32 %v814, 2147483648
        %v1038 = vsel %vm1036, %v1037, %v1035
        %v1039 = vrsqrt.pop %v819
        %v1040 = vmul.f32 %v819, %v1039
        %vm1041 = vcmp.eq.f32.partialorder %v819, inf
        %v1042 = vsel %vm1041, %v819, %v1040
        %vm1043 = vcmp.eq.f32.partialorder %v819, 0.0
        %v1044 = vand.u32 %v819, 2147483648
        %v1045 = vsel %vm1043, %v1044, %v1042
        %v1046 = vrsqrt.pop %v824
        %v1047 = vmul.f32 %v824, %v1046
        %vm1048 = vcmp.eq.f32.partialorder %v824, inf
        %v1049 = vsel %vm1048, %v824, %v1047
        %vm1050 = vcmp.eq.f32.partialorder %v824, 0.0
        %v1051 = vand.u32 %v824, 2147483648
        %v1052 = vsel %vm1050, %v1051, %v1049
        %v1053 = vrsqrt.pop %v829
        %v1054 = vmul.f32 %v829, %v1053
        %vm1055 = vcmp.eq.f32.partialorder %v829, inf
        %v1056 = vsel %vm1055, %v829, %v1054
        %vm1057 = vcmp.eq.f32.partialorder %v829, 0.0
        %v1058 = vand.u32 %v829, 2147483648
        %v1059 = vsel %vm1057, %v1058, %v1056
        %v1060 = vrsqrt.pop %v834
        %v1061 = vmul.f32 %v834, %v1060
        %vm1062 = vcmp.eq.f32.partialorder %v834, inf
        %v1063 = vsel %vm1062, %v834, %v1061
        %vm1064 = vcmp.eq.f32.partialorder %v834, 0.0
        %v1065 = vand.u32 %v834, 2147483648
        %v1066 = vsel %vm1064, %v1065, %v1063
        %v1067 = vrsqrt.pop %v839
        %v1068 = vmul.f32 %v839, %v1067
        %vm1069 = vcmp.eq.f32.partialorder %v839, inf
        %v1070 = vsel %vm1069, %v839, %v1068
        %vm1071 = vcmp.eq.f32.partialorder %v839, 0.0
        %v1072 = vand.u32 %v839, 2147483648
        %v1073 = vsel %vm1071, %v1072, %v1070
        %v1074 = vrsqrt.pop %v844
        %v1075 = vmul.f32 %v844, %v1074
        %vm1076 = vcmp.eq.f32.partialorder %v844, inf
        %v1077 = vsel %vm1076, %v844, %v1075
        %vm1078 = vcmp.eq.f32.partialorder %v844, 0.0
        %v1079 = vand.u32 %v844, 2147483648
        %v1080 = vsel %vm1078, %v1079, %v1077
        %v1081 = vrsqrt.pop %v849
        %v1082 = vmul.f32 %v849, %v1081
        %vm1083 = vcmp.eq.f32.partialorder %v849, inf
        %v1084 = vsel %vm1083, %v849, %v1082
        %vm1085 = vcmp.eq.f32.partialorder %v849, 0.0
        %v1086 = vand.u32 %v849, 2147483648
        %v1087 = vsel %vm1085, %v1086, %v1084
        %v1088 = vrsqrt.pop %v854
        %v1089 = vmul.f32 %v854, %v1088
        %vm1090 = vcmp.eq.f32.partialorder %v854, inf
        %v1091 = vsel %vm1090, %v854, %v1089
        %vm1092 = vcmp.eq.f32.partialorder %v854, 0.0
        %v1093 = vand.u32 %v854, 2147483648
        %v1094 = vsel %vm1092, %v1093, %v1091
        %v1095 = vrsqrt.pop %v859
        %v1096 = vmul.f32 %v859, %v1095
        %vm1097 = vcmp.eq.f32.partialorder %v859, inf
        %v1098 = vsel %vm1097, %v859, %v1096
        %vm1099 = vcmp.eq.f32.partialorder %v859, 0.0
        %v1100 = vand.u32 %v859, 2147483648
        %v1101 = vsel %vm1099, %v1100, %v1098
        %v1102 = vrsqrt.pop %v864
        %v1103 = vmul.f32 %v864, %v1102
        %vm1104 = vcmp.eq.f32.partialorder %v864, inf
        %v1105 = vsel %vm1104, %v864, %v1103
        %vm1106 = vcmp.eq.f32.partialorder %v864, 0.0
        %v1107 = vand.u32 %v864, 2147483648
        %v1108 = vsel %vm1106, %v1107, %v1105
        %v1109 = vrsqrt.pop %v869
        %v1110 = vmul.f32 %v869, %v1109
        %vm1111 = vcmp.eq.f32.partialorder %v869, inf
        %v1112 = vsel %vm1111, %v869, %v1110
        %vm1113 = vcmp.eq.f32.partialorder %v869, 0.0
        %v1114 = vand.u32 %v869, 2147483648
        %v1115 = vsel %vm1113, %v1114, %v1112
        %v1116 = vrsqrt.pop %v874
        %v1117 = vmul.f32 %v874, %v1116
        %vm1118 = vcmp.eq.f32.partialorder %v874, inf
        %v1119 = vsel %vm1118, %v874, %v1117
        %vm1120 = vcmp.eq.f32.partialorder %v874, 0.0
        %v1121 = vand.u32 %v874, 2147483648
        %v1122 = vsel %vm1120, %v1121, %v1119
        %v1123 = vrsqrt.pop %v879
        %v1124 = vmul.f32 %v879, %v1123
        %vm1125 = vcmp.eq.f32.partialorder %v879, inf
        %v1126 = vsel %vm1125, %v879, %v1124
        %vm1127 = vcmp.eq.f32.partialorder %v879, 0.0
        %v1128 = vand.u32 %v879, 2147483648
        %v1129 = vsel %vm1127, %v1128, %v1126
        %v1130 = vrsqrt.pop %v884
        %v1131 = vmul.f32 %v884, %v1130
        %vm1132 = vcmp.eq.f32.partialorder %v884, inf
        %v1133 = vsel %vm1132, %v884, %v1131
        %vm1134 = vcmp.eq.f32.partialorder %v884, 0.0
        %v1135 = vand.u32 %v884, 2147483648
        %v1136 = vsel %vm1134, %v1135, %v1133
        %v1137 = vrsqrt.pop %v889
        %v1138 = vmul.f32 %v889, %v1137
        %vm1139 = vcmp.eq.f32.partialorder %v889, inf
        %v1140 = vsel %vm1139, %v889, %v1138
        %vm1141 = vcmp.eq.f32.partialorder %v889, 0.0
        %v1142 = vand.u32 %v889, 2147483648
        %v1143 = vsel %vm1141, %v1142, %v1140
        %v1144 = vrsqrt.pop %v894
        %v1145 = vmul.f32 %v894, %v1144
        %vm1146 = vcmp.eq.f32.partialorder %v894, inf
        %v1147 = vsel %vm1146, %v894, %v1145
        %vm1148 = vcmp.eq.f32.partialorder %v894, 0.0
        %v1149 = vand.u32 %v894, 2147483648
        %v1150 = vsel %vm1148, %v1149, %v1147
        %v1151 = vrsqrt.pop %v899
        %v1152 = vmul.f32 %v899, %v1151
        %vm1153 = vcmp.eq.f32.partialorder %v899, inf
        %v1154 = vsel %vm1153, %v899, %v1152
        %vm1155 = vcmp.eq.f32.partialorder %v899, 0.0
        %v1156 = vand.u32 %v899, 2147483648
        %v1157 = vsel %vm1155, %v1156, %v1154
        %v1158 = vmul.f32 %v902, %v940
        %v1159 = vmul.f32 %v903, %v947
        %v1160 = vmul.f32 %v904, %v954
        %v1161 = vmul.f32 %v905, %v961
        %v1162 = vmul.f32 %v906, %v968
        %v1163 = vmul.f32 %v907, %v975
        %v1164 = vmul.f32 %v908, %v982
        %v1165 = vmul.f32 %v909, %v989
        %v1166 = vmul.f32 %v910, %v996
        %v1167 = vmul.f32 %v911, %v1003
        %v1168 = vmul.f32 %v912, %v1010
        %v1169 = vmul.f32 %v913, %v1017
        %v1170 = vmul.f32 %v914, %v1024
        %v1171 = vmul.f32 %v915, %v1031
        %v1172 = vmul.f32 %v916, %v1038
        %v1173 = vmul.f32 %v917, %v1045
        %v1174 = vmul.f32 %v918, %v1052
        %v1175 = vmul.f32 %v919, %v1059
        %v1176 = vmul.f32 %v920, %v1066
        %v1177 = vmul.f32 %v921, %v1073
        %v1178 = vmul.f32 %v922, %v1080
        %v1179 = vmul.f32 %v923, %v1087
        %v1180 = vmul.f32 %v924, %v1094
        %v1181 = vmul.f32 %v925, %v1101
        %v1182 = vmul.f32 %v926, %v1108
        %v1183 = vmul.f32 %v927, %v1115
        %v1184 = vmul.f32 %v928, %v1122
        %v1185 = vmul.f32 %v929, %v1129
        %v1186 = vmul.f32 %v930, %v1136
        %v1187 = vmul.f32 %v931, %v1143
        %v1188 = vmul.f32 %v932, %v1150
        %v1189 = vmul.f32 %v933, %v1157
        %v1190 = vadd.f32 %v464, %v1158
        %v1191 = vadd.f32 %v469, %v1159
        %v1192 = vadd.f32 %v474, %v1160
        %v1193 = vadd.f32 %v479, %v1161
        %v1194 = vadd.f32 %v484, %v1162
        %v1195 = vadd.f32 %v489, %v1163
        %v1196 = vadd.f32 %v494, %v1164
        %v1197 = vadd.f32 %v499, %v1165
        %v1198 = vadd.f32 %v504, %v1166
        %v1199 = vadd.f32 %v509, %v1167
        %v1200 = vadd.f32 %v514, %v1168
        %v1201 = vadd.f32 %v519, %v1169
        %v1202 = vadd.f32 %v524, %v1170
        %v1203 = vadd.f32 %v529, %v1171
        %v1204 = vadd.f32 %v534, %v1172
        %v1205 = vadd.f32 %v539, %v1173
        %v1206 = vadd.f32 %v544, %v1174
        %v1207 = vadd.f32 %v549, %v1175
        %v1208 = vadd.f32 %v554, %v1176
        %v1209 = vadd.f32 %v559, %v1177
        %v1210 = vadd.f32 %v564, %v1178
        %v1211 = vadd.f32 %v569, %v1179
        %v1212 = vadd.f32 %v574, %v1180
        %v1213 = vadd.f32 %v579, %v1181
        %v1214 = vadd.f32 %v584, %v1182
        %v1215 = vadd.f32 %v589, %v1183
        %v1216 = vadd.f32 %v594, %v1184
        %v1217 = vadd.f32 %v599, %v1185
        %v1218 = vadd.f32 %v604, %v1186
        %v1219 = vadd.f32 %v609, %v1187
        %v1220 = vadd.f32 %v614, %v1188
        %v1221 = vadd.f32 %v619, %v1189
        %1222 = vst [vmem:[%s338] sm:$0xff] %v1190
        %1223 = vst [vmem:[%s338 + $0x8] sm:$0xff] %v1191
        %1224 = vst [vmem:[%s338 + $0x10] sm:$0xff] %v1192
        %1225 = vst [vmem:[%s338 + $0x18] sm:$0xff] %v1193
        %1226 = vst [vmem:[%s338 + $0x20] sm:$0xff] %v1194
        %1227 = vst [vmem:[%s338 + $0x28] sm:$0xff] %v1195
        %1228 = vst [vmem:[%s338 + $0x30] sm:$0xff] %v1196
        %1229 = vst [vmem:[%s338 + $0x38] sm:$0xff] %v1197
        %1230 = vst [vmem:[%s338 + $0x40] sm:$0xff] %v1198
        %1231 = vst [vmem:[%s338 + $0x48] sm:$0xff] %v1199
        %1232 = vst [vmem:[%s338 + $0x50] sm:$0xff] %v1200
        %1233 = vst [vmem:[%s338 + $0x58] sm:$0xff] %v1201
        %1234 = vst [vmem:[%s338 + $0x60] sm:$0xff] %v1202
        %1235 = vst [vmem:[%s338 + $0x68] sm:$0xff] %v1203
        %1236 = vst [vmem:[%s338 + $0x70] sm:$0xff] %v1204
        %1237 = vst [vmem:[%s338 + $0x78] sm:$0xff] %v1205
        %1238 = vst [vmem:[%s338 + $0x80] sm:$0xff] %v1206
        %1239 = vst [vmem:[%s338 + $0x88] sm:$0xff] %v1207
        %1240 = vst [vmem:[%s338 + $0x90] sm:$0xff] %v1208
        %1241 = vst [vmem:[%s338 + $0x98] sm:$0xff] %v1209
        %1242 = vst [vmem:[%s338 + $0xa0] sm:$0xff] %v1210
        %1243 = vst [vmem:[%s338 + $0xa8] sm:$0xff] %v1211
        %1244 = vst [vmem:[%s338 + $0xb0] sm:$0xff] %v1212
        %1245 = vst [vmem:[%s338 + $0xb8] sm:$0xff] %v1213
        %1246 = vst [vmem:[%s338 + $0xc0] sm:$0xff] %v1214
        %1247 = vst [vmem:[%s338 + $0xc8] sm:$0xff] %v1215
        %1248 = vst [vmem:[%s338 + $0xd0] sm:$0xff] %v1216
        %1249 = vst [vmem:[%s338 + $0xd8] sm:$0xff] %v1217
        %1250 = vst [vmem:[%s338 + $0xe0] sm:$0xff] %v1218
        %1251 = vst [vmem:[%s338 + $0xe8] sm:$0xff] %v1219
        %1252 = vst [vmem:[%s338 + $0xf0] sm:$0xff] %v1220
        %1253 = vst [vmem:[%s338 + $0xf8] sm:$0xff] %v1221
        %s1254 = sand.u32 %s171, 1
        %s1255 = scalar_lea.sflag [#allocation4], %s1254
        %s1256 = sand.u32 %s171, 1
        %s1257 = smul.addr %s1256, 256
        %s1258 = scalar_lea.vmem [#allocation10], %s1257
        // Predicated region
        $region61: #{tpu_custom_call.1} parent=43 // pred_check
          %p1259 = pneg %p181
        $region62: #{tpu_custom_call.1} parent=43 // pred_check_branch
          %1261 = sbr.rel (%p1259) target = $region64
        $region63: #{tpu_custom_call.1} parent=43 // pred_region
          %s1262 = smul.u32 32, %s27
          %s1264 = ssub.s32 4096, 4096
          %1265 = vsyncadd %s1255, %s1264
          %s1266 = smul.addr %s1262, 128
          %s1267 = scalar_lea.hbm %s6, %s1266
          %s1268 = sshll.u32 %s1258, 4
          %s1269 = int_to_ptr.vmem [resolvable:$true] %s1268
          %1274 = dma.vmem_to_hbm [thread:$0]  %s1269, 4096, %s1267, %s1255, 128, 128, 8
        $region64: #{tpu_custom_call.1} parent=43 // pred_fallthru
          _
      $region44: #{tpu_custom_call.1} parent=5 // pred_fallthru
        _
      %p1275 = scmp.le.s32.totalorder 2, %s22
      // Predicated region
      $region65: #{tpu_custom_call.1} parent=5 // pred_check
        %p1276 = pneg %p1275
      $region66: #{tpu_custom_call.1} parent=5 // pred_check_branch
        %1278 = sbr.rel (%p1276) target = $region68
      $region67: #{tpu_custom_call.1} parent=5 // pred_region
        %s1279 = ssub.s32 %s22, 2
        // Predicated region
        $region69: #{tpu_custom_call.1} parent=67 // pred_check
          %p1280 = pneg %p187
        $region70: #{tpu_custom_call.1} parent=67 // pred_check_branch
          %1282 = sbr.rel (%p1280) target = $region72
        $region71: #{tpu_custom_call.1} parent=67 // pred_region
          %s1283 = sand.u32 %s172, 1
          %s1284 = scalar_lea.sflag [#allocation4], %s1283
          %s1285 = sand.u32 %s172, 1
          %s1286 = smul.addr %s1285, 256
          %s1287 = scalar_lea.vmem [#allocation10], %s1286
          %1288 = dma.done %s1284, 4096
        $region72: #{tpu_custom_call.1} parent=67 // pred_fallthru
          _
      $region68: #{tpu_custom_call.1} parent=5 // pred_fallthru
        _
    $region6: #{tpu_custom_call.1} parent=1 // loop_footer
      %s26 = sadd.s32 1, %s22
    $region7: #{tpu_custom_call.1} parent=1 // loop_footer_branch
      %21 = sbr.rel target = $region3
    $region8: #{tpu_custom_call.1} parent=1 // loop_exit
      _
    %1289 = vsyncpa [#allocation3], 1
    %s1290 = scalar_lea.sflag [#allocation3], 1
    %1291 = vsyncpa %s1290, 1
    %1292 = vsyncpa [#allocation6], 1
    %1293 = vsyncpa [#allocation9], 1
    %s1294 = scalar_lea.sflag [#allocation9], 1
    %1295 = vsyncpa %s1294, 1
    %1296 = vsyncpa [#allocation4], 1
    %s1297 = scalar_lea.sflag [#allocation4], 1
    %1298 = vsyncpa %s1297, 1

</llo_original>
